<compile_context>
chip_gen: v5e
topology: v5e:2x2
jax: 0.10.0
libtpu: 0.0.40
codegen_flags: <defaults>
</compile_context>

<pallas_src>
import functools

import jax
import jax.numpy as jnp
from jax.experimental import pallas as pl
from jax.experimental.pallas import tpu as pltpu


def _round_up(x, m):
    return (x + m - 1) // m * m


def _fused_mlp_kernel(x_ref, w0_ref, b0_ref, wm_ref, bm_ref, wl_ref, bl_ref,
                      o_ref, act_ref):
    """One (batch_tile, layer) grid step of the fused MLP."""
    l = pl.program_id(1)
    nl = pl.num_programs(1)

    # Layer 0: y = x @ W0 + b0, ReLU -> resident bf16 activation.
    @pl.when(l == 0)
    def _first():
        y = jnp.dot(x_ref[...], w0_ref[...], preferred_element_type=jnp.float32)
        y = y + b0_ref[...]
        act_ref[...] = jnp.maximum(y, 0.0).astype(act_ref.dtype)

    # Hidden layers 1 .. nl-2: y = act @ Wmid[l-1] + bmid[l-1], ReLU.
    @pl.when(jnp.logical_and(l > 0, l < nl - 1))
    def _mid():
        y = jnp.dot(act_ref[...], wm_ref[0], preferred_element_type=jnp.float32)
        y = y + bm_ref[0]
        act_ref[...] = jnp.maximum(y, 0.0).astype(act_ref.dtype)

    # Final ('output') layer: no activation, write to HBM output block.
    @pl.when(l == nl - 1)
    def _last():
        y = jnp.dot(act_ref[...], wl_ref[...], preferred_element_type=jnp.float32)
        y = y + bl_ref[...]
        o_ref[...] = y.astype(o_ref.dtype)


def pack_mlp_params(params):
    """One-time packing of per-layer weights into lane-aligned padded arrays.

    params: list of (w, b, has_act) with w shaped (fan_in, fan_out)
            (i.e. PyTorch Linear weight transposed).
    Zero padding of weight rows/cols and biases keeps padded activation
    columns exactly 0 through ReLU (correctness invariant).
    """
    num_layers = len(params)
    assert num_layers >= 2, "fused kernel expects >= 2 Linear layers (layers >= 3)"
    assert all(a for (_, _, a) in params[:-1]) and not params[-1][2]

    in_f = params[0][0].shape[0]
    hid = params[0][0].shape[1]
    out_f = params[-1][0].shape[1]
    in_p = _round_up(in_f, 128)
    h_p = _round_up(hid, 128)
    out_p = _round_up(out_f, 128)
    n_mid = max(num_layers - 2, 1)   # dummy zero block if there are no mid layers

    w0 = jnp.zeros((in_p, h_p), jnp.bfloat16).at[:in_f, :hid].set(
        params[0][0].astype(jnp.bfloat16))
    b0 = jnp.zeros((1, h_p), jnp.float32).at[0, :hid].set(
        params[0][1].astype(jnp.float32))

    w_mid = jnp.zeros((n_mid, h_p, h_p), jnp.bfloat16)
    b_mid = jnp.zeros((n_mid, 1, h_p), jnp.float32)
    for i, (w, b, _) in enumerate(params[1:-1]):
        w_mid = w_mid.at[i, : w.shape[0], : w.shape[1]].set(w.astype(jnp.bfloat16))
        b_mid = b_mid.at[i, 0, : b.shape[0]].set(b.astype(jnp.float32))

    wl = params[-1][0]
    w_last = jnp.zeros((h_p, out_p), jnp.bfloat16).at[: wl.shape[0], :out_f].set(
        wl.astype(jnp.bfloat16))
    b_last = jnp.zeros((1, out_p), jnp.float32).at[0, :out_f].set(
        params[-1][1].astype(jnp.float32))

    return dict(w0=w0, b0=b0, w_mid=w_mid, b_mid=b_mid,
                w_last=w_last, b_last=b_last,
                num_layers=num_layers, out_features=out_f)


@functools.partial(jax.jit, static_argnames=("num_layers", "out_features"))
def mlp_forward(x, w0, b0, w_mid, b_mid, w_last, b_last, *,
                num_layers, out_features):
    """Fused Pallas forward of the whole MLP (eval mode: dropout = identity)."""
    batch, in_f = x.shape
    in_p, h_p = w0.shape
    out_p = w_last.shape[1]
    n_mid = w_mid.shape[0]

    # Batch tiling: 256-row tiles for large batches (feeds the 256-wide MXU and
    # both TensorCores via the "parallel" axis); small batches use one tile
    # rounded to a multiple of 16 (clean bf16 sublane packing).
    bt = 256 if batch > 256 else _round_up(batch, 16)
    bp = _round_up(batch, bt)
    n_btiles = bp // bt

    # Only wrapper-side op per call: lane-dense bf16 input padding.
    x_p = jnp.zeros((bp, in_p), jnp.bfloat16).at[:batch, :in_f].set(
        x.astype(jnp.bfloat16))

    mid_idx = lambda m, l: (jnp.clip(l - 1, 0, n_mid - 1), 0, 0)

    # Conservative VMEM footprint estimate (double buffers + scratch).
    est = (2 * bt * in_p * 2          # x tile (bf16)
           + 2 * in_p * h_p * 2       # W0 (bf16)
           + 2 * h_p * 4              # b0
           + 2 * h_p * h_p * 2        # streamed hidden weight (bf16)
           + 2 * h_p * 4              # hidden bias
           + 2 * h_p * out_p * 2      # W_last (bf16)
           + 2 * out_p * 4            # b_last
           + 2 * bt * out_p * 4       # output tile (f32)
           + bt * h_p * 2)            # resident activation scratch (bf16)
    vmem_limit = int(min(max(2 * est, 16 << 20), 64 << 20))

    out_pad = pl.pallas_call(
        _fused_mlp_kernel,
        out_shape=jax.ShapeDtypeStruct((bp, out_p), jnp.float32),
        grid=(n_btiles, num_layers),
        in_specs=[
            # input tile: fetched once per batch tile
            pl.BlockSpec((bt, in_p), lambda m, l: (m, 0)),
            # first-layer weight/bias: constant index -> resident
            pl.BlockSpec((in_p, h_p), lambda m, l: (0, 0)),
            pl.BlockSpec((1, h_p), lambda m, l: (0, 0)),
            # hidden stack: streamed / double-buffered over the layer axis
            pl.BlockSpec((1, h_p, h_p), mid_idx),
            pl.BlockSpec((1, 1, h_p), mid_idx),
            # last-layer weight/bias: constant index -> resident
            pl.BlockSpec((h_p, out_p), lambda m, l: (0, 0)),
            pl.BlockSpec((1, out_p), lambda m, l: (0, 0)),
        ],
        out_specs=pl.BlockSpec((bt, out_p), lambda m, l: (m, 0)),
        scratch_shapes=[pltpu.VMEM((bt, h_p), jnp.bfloat16)],  # resident activation
        compiler_params=pltpu.CompilerParams(
            dimension_semantics=("parallel", "arbitrary"),
            vmem_limit_bytes=vmem_limit),
    )(x_p, w0, b0, w_mid, b_mid, w_last, b_last)

    return out_pad[:batch, :out_features]


def init_mlp_params(key, input_size, hidden_size, output_size, layers):
    """Deterministic init mirroring the PyTorch MLP layer structure."""
    dims = []
    for layer in range(layers - 1):
        if layer == 0:
            dims.append((input_size, hidden_size, True))
        elif layer == layers - 2:
            dims.append((hidden_size, output_size, False))
        else:
            dims.append((hidden_size, hidden_size, True))
    params = []
    for (fan_in, fan_out, has_act) in dims:
        key, kw, kb = jax.random.split(key, 3)
        bound = 1.0 / jnp.sqrt(fan_in)
        # stored as (in, out) -- transpose of PyTorch's (out, in)
        w = jax.random.uniform(kw, (fan_in, fan_out), jnp.float32, -bound, bound)
        b = jax.random.uniform(kb, (fan_out,), jnp.float32, -bound, bound)
        params.append((w, b, has_act))
    return params


if __name__ == "__main__":
    key = jax.random.PRNGKey(0)
    batch, input_size, hidden_size, output_size, layers = 8, 32, 64, 16, 4

    kx, kp = jax.random.split(key)
    x = jax.random.normal(kx, (batch, input_size), jnp.float32)
    params = init_mlp_params(kp, input_size, hidden_size, output_size, layers)

    packed = pack_mlp_params(params)          # one-time, hoisted out of forward
    out = mlp_forward(x,
                      packed["w0"], packed["b0"],
                      packed["w_mid"], packed["b_mid"],
                      packed["w_last"], packed["b_last"],
                      num_layers=packed["num_layers"],
                      out_features=packed["out_features"])
    out = jax.block_until_ready(out)

    # Reference in plain JAX, mirroring the kernel's bf16-matmul / f32-accum path.
    ref = x.astype(jnp.float32)
    for (w, b, has_act) in params:
        ref = jnp.dot(ref.astype(jnp.bfloat16), w.astype(jnp.bfloat16),
                      preferred_element_type=jnp.float32) + b
        if has_act:
            ref = jnp.maximum(ref, 0.0)

    assert out.shape == (batch, output_size)
    assert jnp.allclose(out, ref, atol=2e-2, rtol=2e-2), (
        float(jnp.max(jnp.abs(out - ref))))

    print("KERNEL_OK")
</pallas_src>

<mosaic_0001>
module attributes {stable_mosaic.version = 11 : i64} {
  func.func @_fused_mlp_kernel(%arg0: i32, %arg1: i32, %arg2: memref<16x128xbf16, #tpu.memory_space<vmem>>, %arg3: memref<128x128xbf16, #tpu.memory_space<vmem>>, %arg4: memref<1x128xf32, #tpu.memory_space<vmem>>, %arg5: memref<1x128x128xbf16, #tpu.memory_space<vmem>>, %arg6: memref<1x1x128xf32, #tpu.memory_space<vmem>>, %arg7: memref<128x128xbf16, #tpu.memory_space<vmem>>, %arg8: memref<1x128xf32, #tpu.memory_space<vmem>>, %arg9: memref<16x128xf32, #tpu.memory_space<vmem>>, %arg10: memref<16x128xbf16, #tpu.memory_space<vmem>>) attributes {dimension_semantics = [#tpu.dimension_semantics<parallel>, #tpu.dimension_semantics<arbitrary>], iteration_bounds = array<i64: 1, 3>, scalar_prefetch = 0 : i64, scratch_operands = 1 : i64, tpu.core_type = #tpu.core_type<tc>, window_params = [{transform_indices = @transform_0, window_bounds = array<i64: 16, 128>}, {pipeline_mode = #tpu.pipeline_mode<synchronous>, transform_indices = @transform_1, window_bounds = array<i64: 128, 128>}, {pipeline_mode = #tpu.pipeline_mode<synchronous>, transform_indices = @transform_2, window_bounds = array<i64: 1, 128>}, {transform_indices = @transform_3, window_bounds = array<i64: 1, 128, 128>}, {transform_indices = @transform_4, window_bounds = array<i64: 1, 1, 128>}, {pipeline_mode = #tpu.pipeline_mode<synchronous>, transform_indices = @transform_5, window_bounds = array<i64: 128, 128>}, {pipeline_mode = #tpu.pipeline_mode<synchronous>, transform_indices = @transform_6, window_bounds = array<i64: 1, 128>}, {transform_indices = @transform_7, window_bounds = array<i64: 16, 128>}]} {
    %c0_i32 = arith.constant 0 : i32
    %0 = arith.cmpi eq, %arg1, %c0_i32 : i32
    %1 = arith.extui %0 : i1 to i32
    %c0_i32_0 = arith.constant 0 : i32
    %2 = arith.cmpi ne, %1, %c0_i32_0 : i32
    scf.if %2 {
      %c0 = arith.constant 0 : index
      %c0_5 = arith.constant 0 : index
      %11 = vector.load %arg2[%c0, %c0_5] : memref<16x128xbf16, #tpu.memory_space<vmem>>, vector<16x128xbf16>
      %c0_6 = arith.constant 0 : index
      %c0_7 = arith.constant 0 : index
      %12 = vector.load %arg3[%c0_6, %c0_7] : memref<128x128xbf16, #tpu.memory_space<vmem>>, vector<128x128xbf16>
      %cst = arith.constant dense<0.000000e+00> : vector<16x128xf32>
      %13 = tpu.matmul %11, %12, %cst {dimension_numbers = #tpu.dot_dimension_numbers<[1], [0], [0], [1], [0, 0, 1, 1], [], []>} : vector<16x128xbf16>, vector<128x128xbf16>, vector<16x128xf32> -> vector<16x128xf32>
      %c0_8 = arith.constant 0 : index
      %c0_9 = arith.constant 0 : index
      %14 = vector.load %arg4[%c0_8, %c0_9] : memref<1x128xf32, #tpu.memory_space<vmem>>, vector<1x128xf32>
      %15 = vector.broadcast %14 : vector<1x128xf32> to vector<16x128xf32>
      %16 = arith.addf %13, %15 : vector<16x128xf32>
      %cst_10 = arith.constant 0.000000e+00 : f32
      %17 = vector.broadcast %cst_10 : f32 to vector<16x128xf32>
      %18 = arith.maximumf %16, %17 : vector<16x128xf32>
      %19 = arith.truncf %18 : vector<16x128xf32> to vector<16x128xbf16>
      %c0_11 = arith.constant 0 : index
      %c0_12 = arith.constant 0 : index
      %20 = vector.load %arg10[%c0_11, %c0_12] : memref<16x128xbf16, #tpu.memory_space<vmem>>, vector<16x128xbf16>
      tpu.vector_store %arg10[%c0_11, %c0_12], %19 {strides = array<i32>} : memref<16x128xbf16, #tpu.memory_space<vmem>>, vector<16x128xbf16>,
    } else {
    }
    %c0_i32_1 = arith.constant 0 : i32
    %3 = arith.cmpi sgt, %arg1, %c0_i32_1 : i32
    %c2_i32 = arith.constant 2 : i32
    %4 = arith.cmpi slt, %arg1, %c2_i32 : i32
    %5 = arith.andi %3, %4 : i1
    %6 = arith.extui %5 : i1 to i32
    %c0_i32_2 = arith.constant 0 : i32
    %7 = arith.cmpi ne, %6, %c0_i32_2 : i32
    scf.if %7 {
      %c0 = arith.constant 0 : index
      %c0_5 = arith.constant 0 : index
      %11 = vector.load %arg10[%c0, %c0_5] : memref<16x128xbf16, #tpu.memory_space<vmem>>, vector<16x128xbf16>
      %c0_6 = arith.constant 0 : index
      %c0_7 = arith.constant 0 : index
      %c0_8 = arith.constant 0 : index
      %12 = vector.load %arg5[%c0_6, %c0_7, %c0_8] : memref<1x128x128xbf16, #tpu.memory_space<vmem>>, vector<1x128x128xbf16>
      %13 = vector.shape_cast %12 : vector<1x128x128xbf16> to vector<128x128xbf16>
      %cst = arith.constant dense<0.000000e+00> : vector<16x128xf32>
      %14 = tpu.matmul %11, %13, %cst {dimension_numbers = #tpu.dot_dimension_numbers<[1], [0], [0], [1], [0, 0, 1, 1], [], []>} : vector<16x128xbf16>, vector<128x128xbf16>, vector<16x128xf32> -> vector<16x128xf32>
      %c0_9 = arith.constant 0 : index
      %c0_10 = arith.constant 0 : index
      %c0_11 = arith.constant 0 : index
      %15 = vector.load %arg6[%c0_9, %c0_10, %c0_11] : memref<1x1x128xf32, #tpu.memory_space<vmem>>, vector<1x1x128xf32>
      %16 = vector.shape_cast %15 : vector<1x1x128xf32> to vector<1x128xf32>
      %17 = vector.broadcast %16 : vector<1x128xf32> to vector<16x128xf32>
      %18 = arith.addf %14, %17 : vector<16x128xf32>
      %cst_12 = arith.constant 0.000000e+00 : f32
      %19 = vector.broadcast %cst_12 : f32 to vector<16x128xf32>
      %20 = arith.maximumf %18, %19 : vector<16x128xf32>
      %21 = arith.truncf %20 : vector<16x128xf32> to vector<16x128xbf16>
      %c0_13 = arith.constant 0 : index
      %c0_14 = arith.constant 0 : index
      %22 = vector.load %arg10[%c0_13, %c0_14] : memref<16x128xbf16, #tpu.memory_space<vmem>>, vector<16x128xbf16>
      tpu.vector_store %arg10[%c0_13, %c0_14], %21 {strides = array<i32>} : memref<16x128xbf16, #tpu.memory_space<vmem>>, vector<16x128xbf16>,
    } else {
    }
    %c2_i32_3 = arith.constant 2 : i32
    %8 = arith.cmpi eq, %arg1, %c2_i32_3 : i32
    %9 = arith.extui %8 : i1 to i32
    %c0_i32_4 = arith.constant 0 : i32
    %10 = arith.cmpi ne, %9, %c0_i32_4 : i32
    scf.if %10 {
      %c0 = arith.constant 0 : index
      %c0_5 = arith.constant 0 : index
      %11 = vector.load %arg10[%c0, %c0_5] : memref<16x128xbf16, #tpu.memory_space<vmem>>, vector<16x128xbf16>
      %c0_6 = arith.constant 0 : index
      %c0_7 = arith.constant 0 : index
      %12 = vector.load %arg7[%c0_6, %c0_7] : memref<128x128xbf16, #tpu.memory_space<vmem>>, vector<128x128xbf16>
      %cst = arith.constant dense<0.000000e+00> : vector<16x128xf32>
      %13 = tpu.matmul %11, %12, %cst {dimension_numbers = #tpu.dot_dimension_numbers<[1], [0], [0], [1], [0, 0, 1, 1], [], []>} : vector<16x128xbf16>, vector<128x128xbf16>, vector<16x128xf32> -> vector<16x128xf32>
      %c0_8 = arith.constant 0 : index
      %c0_9 = arith.constant 0 : index
      %14 = vector.load %arg8[%c0_8, %c0_9] : memref<1x128xf32, #tpu.memory_space<vmem>>, vector<1x128xf32>
      %15 = vector.broadcast %14 : vector<1x128xf32> to vector<16x128xf32>
      %16 = arith.addf %13, %15 : vector<16x128xf32>
      %c0_10 = arith.constant 0 : index
      %c0_11 = arith.constant 0 : index
      %17 = vector.load %arg9[%c0_10, %c0_11] : memref<16x128xf32, #tpu.memory_space<vmem>>, vector<16x128xf32>
      tpu.vector_store %arg9[%c0_10, %c0_11], %16 {strides = array<i32>} : memref<16x128xf32, #tpu.memory_space<vmem>>, vector<16x128xf32>,
    } else {
    }
    return
  }
  func.func @transform_0(%arg0: i32, %arg1: i32) -> (i32, i32) {
    %c0_i32 = arith.constant 0 : i32
    %c0_i32_0 = arith.constant 0 : i32
    return %arg0, %c0_i32 : i32, i32
  }
  func.func @transform_1(%arg0: i32, %arg1: i32) -> (i32, i32) {
    %c0_i32 = arith.constant 0 : i32
    %c0_i32_0 = arith.constant 0 : i32
    %c0_i32_1 = arith.constant 0 : i32
    return %c0_i32, %c0_i32_0 : i32, i32
  }
  func.func @transform_2(%arg0: i32, %arg1: i32) -> (i32, i32) {
    %c0_i32 = arith.constant 0 : i32
    %c0_i32_0 = arith.constant 0 : i32
    %c0_i32_1 = arith.constant 0 : i32
    return %c0_i32, %c0_i32_0 : i32, i32
  }
  func.func @transform_3(%arg0: i32, %arg1: i32) -> (i32, i32, i32) {
    %c1_i32 = arith.constant 1 : i32
    %0 = arith.subi %arg1, %c1_i32 : i32
    %c0_i32 = arith.constant 0 : i32
    %c0_i32_0 = arith.constant 0 : i32
    %1 = arith.maxsi %c0_i32, %0 : i32
    %2 = arith.minsi %c0_i32_0, %1 : i32
    %c0_i32_1 = arith.constant 0 : i32
    %c0_i32_2 = arith.constant 0 : i32
    %c0_i32_3 = arith.constant 0 : i32
    return %2, %c0_i32_1, %c0_i32_2 : i32, i32, i32
  }
  func.func @transform_4(%arg0: i32, %arg1: i32) -> (i32, i32, i32) {
    %c1_i32 = arith.constant 1 : i32
    %0 = arith.subi %arg1, %c1_i32 : i32
    %c0_i32 = arith.constant 0 : i32
    %c0_i32_0 = arith.constant 0 : i32
    %1 = arith.maxsi %c0_i32, %0 : i32
    %2 = arith.minsi %c0_i32_0, %1 : i32
    %c0_i32_1 = arith.constant 0 : i32
    %c0_i32_2 = arith.constant 0 : i32
    %c0_i32_3 = arith.constant 0 : i32
    return %2, %c0_i32_1, %c0_i32_2 : i32, i32, i32
  }
  func.func @transform_5(%arg0: i32, %arg1: i32) -> (i32, i32) {
    %c0_i32 = arith.constant 0 : i32
    %c0_i32_0 = arith.constant 0 : i32
    %c0_i32_1 = arith.constant 0 : i32
    return %c0_i32, %c0_i32_0 : i32, i32
  }
  func.func @transform_6(%arg0: i32, %arg1: i32) -> (i32, i32) {
    %c0_i32 = arith.constant 0 : i32
    %c0_i32_0 = arith.constant 0 : i32
    %c0_i32_1 = arith.constant 0 : i32
    return %c0_i32, %c0_i32_0 : i32, i32
  }
  func.func @transform_7(%arg0: i32, %arg1: i32) -> (i32, i32) {
    %c0_i32 = arith.constant 0 : i32
    %c0_i32_0 = arith.constant 0 : i32
    return %arg0, %c0_i32 : i32, i32
  }
}

</mosaic_0001>

<llo_original>
// kernel: mlp_forward.1
$region0: #{mlp_forward.1}
  #allocation0 [shape = 'u32[]', space=smem, size = 0x4, offset = 0x4, fixed_abs, tag = 'smem constant byte address 0x4 - core index']
  #allocation1 [shape = 'u32[72,128]{1,0:T(1,128)}', space=vmem, size = 0x9000, scoped, tag = 'internal scratch']
  #allocation2 [shape = 'bf16[16,128]{1,0:T(8,128)(2,1)}', space=vmem, size = 0x1000, scoped, tag = 'scratch operand']
  %s0 = inlined_call_operand.vmem [shape: bf16[16,128], index: 0, kind: input, shape index: {}]
  %s1 = inlined_call_operand.hbm [shape: bf16[128,128], index: 1, kind: input, shape index: {}]
  %s2 = inlined_call_operand.vmem [shape: f32[1,128], index: 2, kind: input, shape index: {}]
  %s3 = inlined_call_operand.hbm [shape: bf16[1,128,128], index: 3, kind: input, shape index: {}]
  %s4 = inlined_call_operand.vmem [shape: f32[1,1,128], index: 4, kind: input, shape index: {}]
  %s5 = inlined_call_operand.hbm [shape: bf16[128,128], index: 5, kind: input, shape index: {}]
  %s6 = inlined_call_operand.vmem [shape: f32[1,128], index: 6, kind: input, shape index: {}]
  %s7 = inlined_call_operand.vmem [shape: f32[16,128], index: 7, kind: output, shape index: {}]
  %s8 = sld [smem:[#allocation0]]
  $region85: #{mlp_forward.1} parent=0
    _
  %s10 = ssub.s32 1, %s8
  %s11 = scalar_select 0, %s10, %s8
  $region1: #{mlp_forward.1} parent=0
    #allocation3 [shape = 'u8[32768]{0}', space=vmem, size = 0x8000, scoped, tag = 'input window, operand 1, single buffered']
    #allocation4 [shape = 's32[2]{0}', space=sflag, size = 0x8, scoped, tag = 'scoped memory for mlp_forward.1']
    #allocation5 [shape = 'u8[65536]{0}', space=vmem, size = 0x10000, scoped, tag = 'input window, operand 3']
    #allocation6 [shape = 's32[2]{0}', space=sflag, size = 0x8, scoped, tag = 'scoped memory for mlp_forward.1']
    #allocation7 [shape = 'u8[32768]{0}', space=vmem, size = 0x8000, scoped, tag = 'input window, operand 5, single buffered']
    %12 = vsyncpa [#allocation4], 0
    %13 = vsyncpa [#allocation6], 0
    %s14 = scalar_lea.sflag [#allocation6], 1
    %15 = vsyncpa %s14, 0
    loop: start=0, step=1, limit=5
    $region2: #{mlp_forward.1} parent=1 // loop_pre_header
      _
    $region3: #{mlp_forward.1} parent=1 // loop_header
      %s17 = sphi 0, %s21
      %p18 = scmp.ge.s32.totalorder %s17, 5
      %s24 = sphi 0, %s36
      %s25 = sphi 0, %s32
      %s26 = sphi 0, %s24
      %s27 = sphi 0, %s25
      %s28 = sphi 0, %s26
      %s29 = sphi 0, %s27
      %s39 = sphi 0, %s41
      %s42 = sphi 0, %s39
      %s43 = sphi 0, %s42
      %s59 = sphi 0, %s43
      %s63 = sphi 0, %s63
      %s65 = sphi 0, %s63
      %s66 = sphi 0, %s65
      %s80 = sphi 0, %s66
      %s84 = sphi 0, %s84
      %s86 = sphi 0, %s84
      %s87 = sphi 0, %s86
      %s101 = sphi 0, %s87
      %s117 = sphi 0, %s119
      %s120 = sphi 0, %s117
      %s121 = sphi 0, %s120
      %s137 = sphi 0, %s121
      %s153 = sphi 0, %s155
      %s156 = sphi 0, %s153
      %s157 = sphi 0, %s156
      %s173 = sphi 0, %s157
      %s177 = sphi 0, %s177
      %s179 = sphi 0, %s177
      %s180 = sphi 0, %s179
      %s194 = sphi 0, %s180
      %s198 = sphi 0, %s198
      %s200 = sphi 0, %s198
      %s201 = sphi 0, %s200
      %s215 = sphi 0, %s201
      %s221 = sphi 0, %s223
      %s224 = sphi 0, %s221
      %s225 = sphi 0, %s224
      %s241 = sphi 0, %s225
    $region4: #{mlp_forward.1} parent=1 // loop_header_branch
      %20 = sbr.rel (%p18) target = $region8
    $region5: #{mlp_forward.1} parent=1 // loop_body
      %s22 = ssub.s32 %s17, 1
      %s23 = ssub.s32 %s17, 2
      %s30 = sadd.s32 1, %s25
      %p31 = scmp.ge.s32.totalorder %s30, 3
      %s32 = scalar_select %p31, 0, %s30
      %s33 = sadd.s32 1, %s24
      %s34 = scalar_select %p31, %s33, %s24
      %p35 = scmp.ge.s32.totalorder %s34, 1
      %s36 = scalar_select %p35, 0, %s34
      %s37 = ssub.s32 %s24, %s36
      %p38 = scmp.eq.s32.totalorder %s37, 0
      %s40 = sadd.s32 %s39, 1
      %s41 = scalar_select %p38, %s39, %s40
      %p44 = pneg %p38
      %p45 = scmp.eq.s32.totalorder %s17, 2
      %p46 = por %p44, %p45
      %p47 = scmp.ne.s32.totalorder %s39, %s42
      %p48 = scmp.eq.s32.totalorder %s17, 0
      %p49 = por %p47, %p48
      %p50 = scmp.ne.s32.totalorder %s39, %s42
      %p51 = scmp.eq.s32.totalorder %s22, 2
      %p52 = por %p50, %p51
      %p53 = scmp.ne.s32.totalorder %s42, %s43
      %p54 = scmp.eq.s32.totalorder %s22, 0
      %p55 = por %p53, %p54
      %p56 = scmp.ne.s32.totalorder %s42, %s43
      %p57 = scmp.eq.s32.totalorder %s23, 2
      %p58 = por %p56, %p57
      %p60 = scmp.ne.s32.totalorder %s43, %s59
      %p61 = scmp.eq.s32.totalorder %s23, 0
      %p62 = por %p60, %p61
      %s64 = sadd.s32 %s63, 1
      %p67 = scmp.eq.s32.totalorder %s17, 2
      %p68 = scmp.ne.s32.totalorder %s63, %s65
      %p69 = scmp.eq.s32.totalorder %s17, 0
      %p70 = por %p68, %p69
      %p71 = scmp.ne.s32.totalorder %s63, %s65
      %p72 = scmp.eq.s32.totalorder %s22, 2
      %p73 = por %p71, %p72
      %p74 = scmp.ne.s32.totalorder %s65, %s66
      %p75 = scmp.eq.s32.totalorder %s22, 0
      %p76 = por %p74, %p75
      %p77 = scmp.ne.s32.totalorder %s65, %s66
      %p78 = scmp.eq.s32.totalorder %s23, 2
      %p79 = por %p77, %p78
      %p81 = scmp.ne.s32.totalorder %s66, %s80
      %p82 = scmp.eq.s32.totalorder %s23, 0
      %p83 = por %p81, %p82
      %s85 = sadd.s32 %s84, 1
      %p88 = scmp.eq.s32.totalorder %s17, 2
      %p89 = scmp.ne.s32.totalorder %s84, %s86
      %p90 = scmp.eq.s32.totalorder %s17, 0
      %p91 = por %p89, %p90
      %p92 = scmp.ne.s32.totalorder %s84, %s86
      %p93 = scmp.eq.s32.totalorder %s22, 2
      %p94 = por %p92, %p93
      %p95 = scmp.ne.s32.totalorder %s86, %s87
      %p96 = scmp.eq.s32.totalorder %s22, 0
      %p97 = por %p95, %p96
      %p98 = scmp.ne.s32.totalorder %s86, %s87
      %p99 = scmp.eq.s32.totalorder %s23, 2
      %p100 = por %p98, %p99
      %p102 = scmp.ne.s32.totalorder %s87, %s101
      %p103 = scmp.eq.s32.totalorder %s23, 0
      %p104 = por %p102, %p103
      %s105 = ssub.s32 %s25, 1
      %p106 = scmp.gt.s32.totalorder %s105, 0
      %s107 = scalar_select %p106, %s105, 0
      %p108 = scmp.lt.s32.totalorder %s107, 0
      %s109 = scalar_select %p108, %s107, 0
      %s110 = ssub.s32 %s32, 1
      %p111 = scmp.gt.s32.totalorder %s110, 0
      %s112 = scalar_select %p111, %s110, 0
      %p113 = scmp.lt.s32.totalorder %s112, 0
      %s114 = scalar_select %p113, %s112, 0
      %s115 = ssub.s32 %s109, %s114
      %p116 = scmp.eq.s32.totalorder %s115, 0
      %s118 = sadd.s32 %s117, 1
      %s119 = scalar_select %p116, %s117, %s118
      %p122 = pneg %p116
      %p123 = scmp.eq.s32.totalorder %s17, 2
      %p124 = por %p122, %p123
      %p125 = scmp.ne.s32.totalorder %s117, %s120
      %p126 = scmp.eq.s32.totalorder %s17, 0
      %p127 = por %p125, %p126
      %p128 = scmp.ne.s32.totalorder %s117, %s120
      %p129 = scmp.eq.s32.totalorder %s22, 2
      %p130 = por %p128, %p129
      %p131 = scmp.ne.s32.totalorder %s120, %s121
      %p132 = scmp.eq.s32.totalorder %s22, 0
      %p133 = por %p131, %p132
      %p134 = scmp.ne.s32.totalorder %s120, %s121
      %p135 = scmp.eq.s32.totalorder %s23, 2
      %p136 = por %p134, %p135
      %p138 = scmp.ne.s32.totalorder %s121, %s137
      %p139 = scmp.eq.s32.totalorder %s23, 0
      %p140 = por %p138, %p139
      %s141 = ssub.s32 %s25, 1
      %p142 = scmp.gt.s32.totalorder %s141, 0
      %s143 = scalar_select %p142, %s141, 0
      %p144 = scmp.lt.s32.totalorder %s143, 0
      %s145 = scalar_select %p144, %s143, 0
      %s146 = ssub.s32 %s32, 1
      %p147 = scmp.gt.s32.totalorder %s146, 0
      %s148 = scalar_select %p147, %s146, 0
      %p149 = scmp.lt.s32.totalorder %s148, 0
      %s150 = scalar_select %p149, %s148, 0
      %s151 = ssub.s32 %s145, %s150
      %p152 = scmp.eq.s32.totalorder %s151, 0
      %s154 = sadd.s32 %s153, 1
      %s155 = scalar_select %p152, %s153, %s154
      %p158 = pneg %p152
      %p159 = scmp.eq.s32.totalorder %s17, 2
      %p160 = por %p158, %p159
      %p161 = scmp.ne.s32.totalorder %s153, %s156
      %p162 = scmp.eq.s32.totalorder %s17, 0
      %p163 = por %p161, %p162
      %p164 = scmp.ne.s32.totalorder %s153, %s156
      %p165 = scmp.eq.s32.totalorder %s22, 2
      %p166 = por %p164, %p165
      %p167 = scmp.ne.s32.totalorder %s156, %s157
      %p168 = scmp.eq.s32.totalorder %s22, 0
      %p169 = por %p167, %p168
      %p170 = scmp.ne.s32.totalorder %s156, %s157
      %p171 = scmp.eq.s32.totalorder %s23, 2
      %p172 = por %p170, %p171
      %p174 = scmp.ne.s32.totalorder %s157, %s173
      %p175 = scmp.eq.s32.totalorder %s23, 0
      %p176 = por %p174, %p175
      %s178 = sadd.s32 %s177, 1
      %p181 = scmp.eq.s32.totalorder %s17, 2
      %p182 = scmp.ne.s32.totalorder %s177, %s179
      %p183 = scmp.eq.s32.totalorder %s17, 0
      %p184 = por %p182, %p183
      %p185 = scmp.ne.s32.totalorder %s177, %s179
      %p186 = scmp.eq.s32.totalorder %s22, 2
      %p187 = por %p185, %p186
      %p188 = scmp.ne.s32.totalorder %s179, %s180
      %p189 = scmp.eq.s32.totalorder %s22, 0
      %p190 = por %p188, %p189
      %p191 = scmp.ne.s32.totalorder %s179, %s180
      %p192 = scmp.eq.s32.totalorder %s23, 2
      %p193 = por %p191, %p192
      %p195 = scmp.ne.s32.totalorder %s180, %s194
      %p196 = scmp.eq.s32.totalorder %s23, 0
      %p197 = por %p195, %p196
      %s199 = sadd.s32 %s198, 1
      %p202 = scmp.eq.s32.totalorder %s17, 2
      %p203 = scmp.ne.s32.totalorder %s198, %s200
      %p204 = scmp.eq.s32.totalorder %s17, 0
      %p205 = por %p203, %p204
      %p206 = scmp.ne.s32.totalorder %s198, %s200
      %p207 = scmp.eq.s32.totalorder %s22, 2
      %p208 = por %p206, %p207
      %p209 = scmp.ne.s32.totalorder %s200, %s201
      %p210 = scmp.eq.s32.totalorder %s22, 0
      %p211 = por %p209, %p210
      %p212 = scmp.ne.s32.totalorder %s200, %s201
      %p213 = scmp.eq.s32.totalorder %s23, 2
      %p214 = por %p212, %p213
      %p216 = scmp.ne.s32.totalorder %s201, %s215
      %p217 = scmp.eq.s32.totalorder %s23, 0
      %p218 = por %p216, %p217
      %s219 = ssub.s32 %s24, %s36
      %p220 = scmp.eq.s32.totalorder %s219, 0
      %s222 = sadd.s32 %s221, 1
      %s223 = scalar_select %p220, %s221, %s222
      %p226 = pneg %p220
      %p227 = scmp.eq.s32.totalorder %s17, 2
      %p228 = por %p226, %p227
      %p229 = scmp.ne.s32.totalorder %s221, %s224
      %p230 = scmp.eq.s32.totalorder %s17, 0
      %p231 = por %p229, %p230
      %p232 = scmp.ne.s32.totalorder %s221, %s224
      %p233 = scmp.eq.s32.totalorder %s22, 2
      %p234 = por %p232, %p233
      %p235 = scmp.ne.s32.totalorder %s224, %s225
      %p236 = scmp.eq.s32.totalorder %s22, 0
      %p237 = por %p235, %p236
      %p238 = scmp.ne.s32.totalorder %s224, %s225
      %p239 = scmp.eq.s32.totalorder %s23, 2
      %p240 = por %p238, %p239
      %p242 = scmp.ne.s32.totalorder %s225, %s241
      %p243 = scmp.eq.s32.totalorder %s23, 0
      %p244 = por %p242, %p243
      %p245 = scmp.le.s32.totalorder 1, %s17
      %p246 = scmp.lt.s32.totalorder %s17, 4
      %p247 = pnand %p245, %p246
      %p248 = pneg %p247
      // Predicated region
      $region9: #{mlp_forward.1} parent=5 // pred_check
        _
      $region10: #{mlp_forward.1} parent=5 // pred_check_branch
        %250 = sbr.rel (%p247) target = $region12
      $region11: #{mlp_forward.1} parent=5 // pred_region
        %s251 = ssub.s32 %s17, 1
        // Predicated region
        $region13: #{mlp_forward.1} parent=11 // pred_check
          %p252 = pneg %p55
        $region14: #{mlp_forward.1} parent=11 // pred_check_branch
          %254 = sbr.rel (%p252) target = $region16
        $region15: #{mlp_forward.1} parent=11 // pred_region
          %s255 = smul.u32 2, %s26
          %p256 = scmp.lt.s32.totalorder %s255, 1
          %s257 = scalar_select %p256, %s255, 1
          %s258 = smul.addr %s257, 4
          %s259 = scalar_lea.vmem %s0, %s258
          %s260 = smul.u32 2, %s26
        $region16: #{mlp_forward.1} parent=11 // pred_fallthru
          _
        // Predicated region
        $region17: #{mlp_forward.1} parent=11 // pred_check
          %p261 = pneg %p76
        $region18: #{mlp_forward.1} parent=11 // pred_check_branch
          %263 = sbr.rel (%p261) target = $region20
        $region19: #{mlp_forward.1} parent=11 // pred_region
          %265 = vsyncadd [#allocation4], 0
          %s266 = sshll.u32 %s1, 4
          %s267 = int_to_ptr.hbm [resolvable:$true] %s266
          %s268 = sshll.u32 [#allocation3], 4
          %s269 = int_to_ptr.vmem [resolvable:$true] %s268
          %274 = dma.hbm_to_vmem [thread:$0]  %s267, 1024, %s269, [#allocation4], 64, 64, 4
        $region20: #{mlp_forward.1} parent=11 // pred_fallthru
          _
        // Predicated region
        $region21: #{mlp_forward.1} parent=11 // pred_check
          %p275 = pneg %p97
        $region22: #{mlp_forward.1} parent=11 // pred_check_branch
          %277 = sbr.rel (%p275) target = $region24
        $region23: #{mlp_forward.1} parent=11 // pred_region
          _
        $region24: #{mlp_forward.1} parent=11 // pred_fallthru
          _
        // Predicated region
        $region25: #{mlp_forward.1} parent=11 // pred_check
          %p278 = pneg %p190
        $region26: #{mlp_forward.1} parent=11 // pred_check_branch
          %280 = sbr.rel (%p278) target = $region28
        $region27: #{mlp_forward.1} parent=11 // pred_region
          %282 = vsyncadd [#allocation6], 0
          %s283 = sshll.u32 %s5, 4
          %s284 = int_to_ptr.hbm [resolvable:$true] %s283
          %s285 = sshll.u32 [#allocation7], 4
          %s286 = int_to_ptr.vmem [resolvable:$true] %s285
          %291 = dma.hbm_to_vmem [thread:$0]  %s284, 1024, %s286, [#allocation6], 64, 64, 4
        $region28: #{mlp_forward.1} parent=11 // pred_fallthru
          _
        // Predicated region
        $region29: #{mlp_forward.1} parent=11 // pred_check
          %p292 = pneg %p211
        $region30: #{mlp_forward.1} parent=11 // pred_check_branch
          %294 = sbr.rel (%p292) target = $region32
        $region31: #{mlp_forward.1} parent=11 // pred_region
          _
        $region32: #{mlp_forward.1} parent=11 // pred_fallthru
          _
      $region12: #{mlp_forward.1} parent=5 // pred_fallthru
        _
      %p295 = scmp.lt.s32.totalorder %s17, 3
      // Predicated region
      $region33: #{mlp_forward.1} parent=5 // pred_check
        %p296 = pneg %p295
      $region34: #{mlp_forward.1} parent=5 // pred_check_branch
        %298 = sbr.rel (%p296) target = $region36
      $region35: #{mlp_forward.1} parent=5 // pred_region
        // Predicated region
        $region37: #{mlp_forward.1} parent=35 // pred_check
          %p299 = pneg %p127
        $region38: #{mlp_forward.1} parent=35 // pred_check_branch
          %301 = sbr.rel (%p299) target = $region40
        $region39: #{mlp_forward.1} parent=35 // pred_region
          %s302 = sand.u32 %s17, 1
          %s303 = scalar_lea.sflag [#allocation6], %s302
          %s304 = sand.u32 %s117, 1
          %s305 = smul.addr %s304, 64
          %s306 = scalar_lea.vmem [#allocation5], %s305
          %s307 = ssub.s32 %s25, 1
          %p308 = scmp.gt.s32.totalorder %s307, 0
          %s309 = scalar_select %p308, %s307, 0
          %p310 = scmp.lt.s32.totalorder %s309, 0
          %s311 = scalar_select %p310, %s309, 0
          %313 = vsyncadd %s303, 0
          %s314 = smul.addr %s311, 16
          %s315 = smul.addr %s314, 4
          %s316 = scalar_lea.hbm %s3, %s315
          %s317 = sshll.u32 %s316, 4
          %s318 = int_to_ptr.hbm [resolvable:$true] %s317
          %s319 = sshll.u32 %s306, 4
          %s320 = int_to_ptr.vmem [resolvable:$true] %s319
          %325 = dma.hbm_to_vmem [thread:$0]  %s318, 1024, %s320, %s303, 64, 64, 4
        $region40: #{mlp_forward.1} parent=35 // pred_fallthru
          _
        // Predicated region
        $region41: #{mlp_forward.1} parent=35 // pred_check
          %p326 = pneg %p163
        $region42: #{mlp_forward.1} parent=35 // pred_check_branch
          %328 = sbr.rel (%p326) target = $region44
        $region43: #{mlp_forward.1} parent=35 // pred_region
          %s329 = ssub.s32 %s25, 1
          %p330 = scmp.gt.s32.totalorder %s329, 0
          %s331 = scalar_select %p330, %s329, 0
          %p332 = scmp.lt.s32.totalorder %s331, 0
          %s333 = scalar_select %p332, %s331, 0
          %p334 = scmp.lt.s32.totalorder %s333, 0
          %s335 = scalar_select %p334, %s333, 0
          %s336 = scalar_lea.vmem %s4, %s335
          %s337 = ssub.s32 %s25, 1
          %p338 = scmp.gt.s32.totalorder %s337, 0
          %s339 = scalar_select %p338, %s337, 0
          %p340 = scmp.lt.s32.totalorder %s339, 0
          %s341 = scalar_select %p340, %s339, 0
        $region44: #{mlp_forward.1} parent=35 // pred_fallthru
          _
      $region36: #{mlp_forward.1} parent=5 // pred_fallthru
        _
      %p342 = scmp.le.s32.totalorder 1, %s17
      %p343 = scmp.lt.s32.totalorder %s17, 4
      %p344 = pnand %p342, %p343
      %p345 = pneg %p344
      // Predicated region
      $region45: #{mlp_forward.1} parent=5 // pred_check
        _
      $region46: #{mlp_forward.1} parent=5 // pred_check_branch
        %347 = sbr.rel (%p344) target = $region48
      $region47: #{mlp_forward.1} parent=5 // pred_region
        %s348 = ssub.s32 %s17, 1
        // Predicated region
        $region49: #{mlp_forward.1} parent=47 // pred_check
          %p349 = pneg %p76
        $region50: #{mlp_forward.1} parent=47 // pred_check_branch
          %351 = sbr.rel (%p349) target = $region52
        $region51: #{mlp_forward.1} parent=47 // pred_region
          %353 = dma.done [#allocation4], 1024
        $region52: #{mlp_forward.1} parent=47 // pred_fallthru
          _
        %s354 = sand.u32 %s22, 1
        %s355 = scalar_lea.sflag [#allocation6], %s354
        %s356 = sand.u32 %s120, 1
        %s357 = smul.addr %s356, 64
        %s358 = scalar_lea.vmem [#allocation5], %s357
        // Predicated region
        $region53: #{mlp_forward.1} parent=47 // pred_check
          %p359 = pneg %p133
        $region54: #{mlp_forward.1} parent=47 // pred_check_branch
          %361 = sbr.rel (%p359) target = $region56
        $region55: #{mlp_forward.1} parent=47 // pred_region
          %363 = dma.done %s355, 1024
        $region56: #{mlp_forward.1} parent=47 // pred_fallthru
          _
        // Predicated region
        $region57: #{mlp_forward.1} parent=47 // pred_check
          %p364 = pneg %p190
        $region58: #{mlp_forward.1} parent=47 // pred_check_branch
          %366 = sbr.rel (%p364) target = $region60
        $region59: #{mlp_forward.1} parent=47 // pred_region
          %368 = dma.done [#allocation6], 1024
        $region60: #{mlp_forward.1} parent=47 // pred_fallthru
          _
        %s369 = smul.u32 2, %s26
        %p370 = scmp.lt.s32.totalorder %s369, 1
        %s371 = scalar_select %p370, %s369, 1
        %s372 = smul.addr %s371, 4
        %s373 = scalar_lea.vmem %s0, %s372
        %p374 = pneg %p55
        %p375 = pneg %p52
        %p376 = pneg %p76
        %p377 = pneg %p73
        %p378 = pneg %p97
        %p379 = pneg %p94
        %s380 = sand.u32 %s22, 1
        %s381 = scalar_lea.sflag [#allocation6], %s380
        %s382 = sand.u32 %s120, 1
        %s383 = smul.addr %s382, 64
        %s384 = scalar_lea.vmem [#allocation5], %s383
        %p385 = pneg %p133
        %p386 = pneg %p130
        %s387 = ssub.s32 %s27, 1
        %p388 = scmp.gt.s32.totalorder %s387, 0
        %s389 = scalar_select %p388, %s387, 0
        %p390 = scmp.lt.s32.totalorder %s389, 0
        %s391 = scalar_select %p390, %s389, 0
        %p392 = scmp.lt.s32.totalorder %s391, 0
        %s393 = scalar_select %p392, %s391, 0
        %s394 = scalar_lea.vmem %s4, %s393
        %p395 = pneg %p169
        %p396 = pneg %p166
        %p397 = pneg %p190
        %p398 = pneg %p187
        %p399 = pneg %p211
        %p400 = pneg %p208
        %p401 = pneg %p237
        %p402 = pneg %p234
        %s403 = smul.u32 2, %s26
        %p404 = scmp.lt.s32.totalorder %s403, 1
        %s405 = scalar_select %p404, %s403, 1
        %s406 = smul.addr %s405, 8
        %s407 = scalar_lea.vmem %s7, %s406
        %s408 = smul.u32 2, %s26
        %p409 = scmp.lt.s32.totalorder %s408, 1
        %s410 = scalar_select %p409, %s408, 1
        %s411 = smul.addr %s410, 4
        %s412 = scalar_lea.vmem %s0, %s411
        %s413 = smul.u32 2, %s26
        %s414 = ssub.s32 %s27, 1
        %p415 = scmp.gt.s32.totalorder %s414, 0
        %s416 = scalar_select %p415, %s414, 0
        %p417 = scmp.lt.s32.totalorder %s416, 0
        %s418 = scalar_select %p417, %s416, 0
        %s419 = ssub.s32 %s27, 1
        %p420 = scmp.gt.s32.totalorder %s419, 0
        %s421 = scalar_select %p420, %s419, 0
        %p422 = scmp.lt.s32.totalorder %s421, 0
        %s423 = scalar_select %p422, %s421, 0
        %p424 = scmp.lt.s32.totalorder %s423, 0
        %s425 = scalar_select %p424, %s423, 0
        %s426 = scalar_lea.vmem %s4, %s425
        %s427 = ssub.s32 %s27, 1
        %p428 = scmp.gt.s32.totalorder %s427, 0
        %s429 = scalar_select %p428, %s427, 0
        %p430 = scmp.lt.s32.totalorder %s429, 0
        %s431 = scalar_select %p430, %s429, 0
        %s432 = smul.u32 2, %s26
        %p433 = scmp.lt.s32.totalorder %s432, 1
        %s434 = scalar_select %p433, %s432, 1
        %s435 = smul.addr %s434, 8
        %s436 = scalar_lea.vmem %s7, %s435
        %s437 = smul.u32 2, %s26
        %p438 = scmp.eq.s32.totalorder %s27, 0
        // Predicated region
        $region61: #{mlp_forward.1} parent=47 // pred_check
          %p439 = pneg %p438
        $region62: #{mlp_forward.1} parent=47 // pred_check_branch
          %441 = sbr.rel (%p439) target = $region64
        $region63: #{mlp_forward.1} parent=47 // pred_region
          %v442 = vld [vmem:[%s412] sm:$0xf]
          %v443 = vld [vmem:[%s412 + $0x4] sm:$0xf]
          %v444 = vld [vmem:[#allocation3] sm:$0xf]
          %v445 = vld [vmem:[#allocation3 + $0x4] sm:$0xf]
          %v446 = vld [vmem:[#allocation3 + $0x8] sm:$0xf]
          %v447 = vld [vmem:[#allocation3 + $0xc] sm:$0xf]
          %v448 = vld [vmem:[#allocation3 + $0x10] sm:$0xf]
          %v449 = vld [vmem:[#allocation3 + $0x14] sm:$0xf]
          %v450 = vld [vmem:[#allocation3 + $0x18] sm:$0xf]
          %v451 = vld [vmem:[#allocation3 + $0x1c] sm:$0xf]
          %v452 = vld [vmem:[#allocation3 + $0x20] sm:$0xf]
          %v453 = vld [vmem:[#allocation3 + $0x24] sm:$0xf]
          %v454 = vld [vmem:[#allocation3 + $0x28] sm:$0xf]
          %v455 = vld [vmem:[#allocation3 + $0x2c] sm:$0xf]
          %v456 = vld [vmem:[#allocation3 + $0x30] sm:$0xf]
          %v457 = vld [vmem:[#allocation3 + $0x34] sm:$0xf]
          %v458 = vld [vmem:[#allocation3 + $0x38] sm:$0xf]
          %v459 = vld [vmem:[#allocation3 + $0x3c] sm:$0xf]
          %v460 = vld [vmem:[%s2] sm:$0x1]
          %v462 = vperm.slane %v460, 0
          %v466 = vunpack.c.l.b16 %v442
          %v467 = vunpack.c.l.b16 %v443
          %v468 = vpack.c.b16 %v467, %v466
          %v486 = vunpack.c.l.b16 %v444
          %v487 = vunpack.c.l.b16 %v445
          %v488 = vunpack.c.l.b16 %v446
          %v489 = vunpack.c.l.b16 %v447
          %v490 = vunpack.c.l.b16 %v448
          %v491 = vunpack.c.l.b16 %v449
          %v492 = vunpack.c.l.b16 %v450
          %v493 = vunpack.c.l.b16 %v451
          %v494 = vunpack.c.l.b16 %v452
          %v495 = vunpack.c.l.b16 %v453
          %v496 = vunpack.c.l.b16 %v454
          %v497 = vunpack.c.l.b16 %v455
          %v498 = vunpack.c.l.b16 %v456
          %v499 = vunpack.c.l.b16 %v457
          %v500 = vunpack.c.l.b16 %v458
          %v501 = vunpack.c.l.b16 %v459
          %v502 = vpack.c.b16 %v487, %v486
          %v503 = vpack.c.b16 %v489, %v488
          %v504 = vpack.c.b16 %v491, %v490
          %v505 = vpack.c.b16 %v493, %v492
          %v506 = vpack.c.b16 %v495, %v494
          %v507 = vpack.c.b16 %v497, %v496
          %v508 = vpack.c.b16 %v499, %v498
          %v509 = vpack.c.b16 %v501, %v500
          %518 = vmatpush.bf16.msra.mxu0 %v509
          %519 = vmatpush.bf16.msra.mxu0 %v508
          %520 = vmatpush.bf16.msra.mxu0 %v507
          %521 = vmatpush.bf16.msra.mxu0 %v506
          %522 = vmatpush.bf16.msra.mxu0 %v505
          %523 = vmatpush.bf16.msra.mxu0 %v504
          %524 = vmatpush.bf16.msra.mxu0 %v503
          %525 = vmatpush.bf16.msra.mxu0 %v502
          %526 = vmatmul.bf16.gmra.mxu0 %v468
          %v527 = vpop.f32.mrf.mxu0
          %v528 = vadd.f32 %v462, %v527
          %v529 = vpop.f32.mrf.mxu0
          %v530 = vadd.f32 %v462, %v529
          %531 = vdwg.mxu0
          %v532 = vmax.f32 %v528, 0.0
          %v533 = vmax.f32 %v530, 0.0
          %v534 = vpack.c.bf16 %v532, %v532
          %v535 = vpack.c.bf16 %v533, %v533
          %536 = vst [vmem:[#allocation2] sm:$0xf] %v534
          %537 = vst [vmem:[#allocation2 + $0x4] sm:$0xf] %v535
        $region64: #{mlp_forward.1} parent=47 // pred_fallthru
          _
        %p538 = scmp.gt.s32.totalorder %s27, 0
        %p539 = scmp.lt.s32.totalorder %s27, 2
        %p540 = pnand %p538, %p539
        %p541 = pneg %p540
        // Predicated region
        $region65: #{mlp_forward.1} parent=47 // pred_check
          _
        $region66: #{mlp_forward.1} parent=47 // pred_check_branch
          %543 = sbr.rel (%p540) target = $region68
        $region67: #{mlp_forward.1} parent=47 // pred_region
          %v544 = vld [vmem:[#allocation2] sm:$0xf]
          %v545 = vld [vmem:[#allocation2 + $0x4] sm:$0xf]
          %v546 = vld [vmem:[%s358] sm:$0xf]
          %v547 = vld [vmem:[%s358 + $0x4] sm:$0xf]
          %v548 = vld [vmem:[%s358 + $0x8] sm:$0xf]
          %v549 = vld [vmem:[%s358 + $0xc] sm:$0xf]
          %v550 = vld [vmem:[%s358 + $0x10] sm:$0xf]
          %v551 = vld [vmem:[%s358 + $0x14] sm:$0xf]
          %v552 = vld [vmem:[%s358 + $0x18] sm:$0xf]
          %v553 = vld [vmem:[%s358 + $0x1c] sm:$0xf]
          %v554 = vld [vmem:[%s358 + $0x20] sm:$0xf]
          %v555 = vld [vmem:[%s358 + $0x24] sm:$0xf]
          %v556 = vld [vmem:[%s358 + $0x28] sm:$0xf]
          %v557 = vld [vmem:[%s358 + $0x2c] sm:$0xf]
          %v558 = vld [vmem:[%s358 + $0x30] sm:$0xf]
          %v559 = vld [vmem:[%s358 + $0x34] sm:$0xf]
          %v560 = vld [vmem:[%s358 + $0x38] sm:$0xf]
          %v561 = vld [vmem:[%s358 + $0x3c] sm:$0xf]
          %v562 = vld [vmem:[%s426] sm:$0x1]
          %v564 = vperm.slane %v562, 0
          %v568 = vunpack.c.l.b16 %v544
          %v569 = vunpack.c.l.b16 %v545
          %v570 = vpack.c.b16 %v569, %v568
          %v588 = vunpack.c.l.b16 %v546
          %v589 = vunpack.c.l.b16 %v547
          %v590 = vunpack.c.l.b16 %v548
          %v591 = vunpack.c.l.b16 %v549
          %v592 = vunpack.c.l.b16 %v550
          %v593 = vunpack.c.l.b16 %v551
          %v594 = vunpack.c.l.b16 %v552
          %v595 = vunpack.c.l.b16 %v553
          %v596 = vunpack.c.l.b16 %v554
          %v597 = vunpack.c.l.b16 %v555
          %v598 = vunpack.c.l.b16 %v556
          %v599 = vunpack.c.l.b16 %v557
          %v600 = vunpack.c.l.b16 %v558
          %v601 = vunpack.c.l.b16 %v559
          %v602 = vunpack.c.l.b16 %v560
          %v603 = vunpack.c.l.b16 %v561
          %v604 = vpack.c.b16 %v589, %v588
          %v605 = vpack.c.b16 %v591, %v590
          %v606 = vpack.c.b16 %v593, %v592
          %v607 = vpack.c.b16 %v595, %v594
          %v608 = vpack.c.b16 %v597, %v596
          %v609 = vpack.c.b16 %v599, %v598
          %v610 = vpack.c.b16 %v601, %v600
          %v611 = vpack.c.b16 %v603, %v602
          %620 = vmatpush.bf16.msra.mxu0 %v611
          %621 = vmatpush.bf16.msra.mxu0 %v610
          %622 = vmatpush.bf16.msra.mxu0 %v609
          %623 = vmatpush.bf16.msra.mxu0 %v608
          %624 = vmatpush.bf16.msra.mxu0 %v607
          %625 = vmatpush.bf16.msra.mxu0 %v606
          %626 = vmatpush.bf16.msra.mxu0 %v605
          %627 = vmatpush.bf16.msra.mxu0 %v604
          %628 = vmatmul.bf16.gmra.mxu0 %v570
          %v629 = vpop.f32.mrf.mxu0
          %v630 = vadd.f32 %v564, %v629
          %v631 = vpop.f32.mrf.mxu0
          %v632 = vadd.f32 %v564, %v631
          %633 = vdwg.mxu0
          %v634 = vmax.f32 %v630, 0.0
          %v635 = vmax.f32 %v632, 0.0
          %v636 = vpack.c.bf16 %v634, %v634
          %v637 = vpack.c.bf16 %v635, %v635
          %638 = vst [vmem:[#allocation2] sm:$0xf] %v636
          %639 = vst [vmem:[#allocation2 + $0x4] sm:$0xf] %v637
        $region68: #{mlp_forward.1} parent=47 // pred_fallthru
          _
        %p640 = scmp.eq.s32.totalorder %s27, 2
        // Predicated region
        $region69: #{mlp_forward.1} parent=47 // pred_check
          %p641 = pneg %p640
        $region70: #{mlp_forward.1} parent=47 // pred_check_branch
          %643 = sbr.rel (%p641) target = $region72
        $region71: #{mlp_forward.1} parent=47 // pred_region
          %v644 = vld [vmem:[#allocation2] sm:$0xf]
          %v645 = vld [vmem:[#allocation2 + $0x4] sm:$0xf]
          %v646 = vld [vmem:[#allocation7] sm:$0xf]
          %v647 = vld [vmem:[#allocation7 + $0x4] sm:$0xf]
          %v648 = vld [vmem:[#allocation7 + $0x8] sm:$0xf]
          %v649 = vld [vmem:[#allocation7 + $0xc] sm:$0xf]
          %v650 = vld [vmem:[#allocation7 + $0x10] sm:$0xf]
          %v651 = vld [vmem:[#allocation7 + $0x14] sm:$0xf]
          %v652 = vld [vmem:[#allocation7 + $0x18] sm:$0xf]
          %v653 = vld [vmem:[#allocation7 + $0x1c] sm:$0xf]
          %v654 = vld [vmem:[#allocation7 + $0x20] sm:$0xf]
          %v655 = vld [vmem:[#allocation7 + $0x24] sm:$0xf]
          %v656 = vld [vmem:[#allocation7 + $0x28] sm:$0xf]
          %v657 = vld [vmem:[#allocation7 + $0x2c] sm:$0xf]
          %v658 = vld [vmem:[#allocation7 + $0x30] sm:$0xf]
          %v659 = vld [vmem:[#allocation7 + $0x34] sm:$0xf]
          %v660 = vld [vmem:[#allocation7 + $0x38] sm:$0xf]
          %v661 = vld [vmem:[#allocation7 + $0x3c] sm:$0xf]
          %v662 = vld [vmem:[%s6] sm:$0x1]
          %v664 = vperm.slane %v662, 0
          %v668 = vunpack.c.l.b16 %v644
          %v669 = vunpack.c.l.b16 %v645
          %v670 = vpack.c.b16 %v669, %v668
          %v688 = vunpack.c.l.b16 %v646
          %v689 = vunpack.c.l.b16 %v647
          %v690 = vunpack.c.l.b16 %v648
          %v691 = vunpack.c.l.b16 %v649
          %v692 = vunpack.c.l.b16 %v650
          %v693 = vunpack.c.l.b16 %v651
          %v694 = vunpack.c.l.b16 %v652
          %v695 = vunpack.c.l.b16 %v653
          %v696 = vunpack.c.l.b16 %v654
          %v697 = vunpack.c.l.b16 %v655
          %v698 = vunpack.c.l.b16 %v656
          %v699 = vunpack.c.l.b16 %v657
          %v700 = vunpack.c.l.b16 %v658
          %v701 = vunpack.c.l.b16 %v659
          %v702 = vunpack.c.l.b16 %v660
          %v703 = vunpack.c.l.b16 %v661
          %v704 = vpack.c.b16 %v689, %v688
          %v705 = vpack.c.b16 %v691, %v690
          %v706 = vpack.c.b16 %v693, %v692
          %v707 = vpack.c.b16 %v695, %v694
          %v708 = vpack.c.b16 %v697, %v696
          %v709 = vpack.c.b16 %v699, %v698
          %v710 = vpack.c.b16 %v701, %v700
          %v711 = vpack.c.b16 %v703, %v702
          %720 = vmatpush.bf16.msra.mxu0 %v711
          %721 = vmatpush.bf16.msra.mxu0 %v710
          %722 = vmatpush.bf16.msra.mxu0 %v709
          %723 = vmatpush.bf16.msra.mxu0 %v708
          %724 = vmatpush.bf16.msra.mxu0 %v707
          %725 = vmatpush.bf16.msra.mxu0 %v706
          %726 = vmatpush.bf16.msra.mxu0 %v705
          %727 = vmatpush.bf16.msra.mxu0 %v704
          %728 = vmatmul.bf16.gmra.mxu0 %v670
          %v729 = vpop.f32.mrf.mxu0
          %v730 = vadd.f32 %v664, %v729
          %v731 = vpop.f32.mrf.mxu0
          %v732 = vadd.f32 %v664, %v731
          %733 = vdwg.mxu0
          %734 = vst [vmem:[%s436] sm:$0xff] %v730
          %735 = vst [vmem:[%s436 + $0x8] sm:$0xff] %v732
        $region72: #{mlp_forward.1} parent=47 // pred_fallthru
          _
        %s736 = smul.u32 2, %s26
        %p737 = scmp.lt.s32.totalorder %s736, 1
        %s738 = scalar_select %p737, %s736, 1
        %s739 = smul.addr %s738, 8
        %s740 = scalar_lea.vmem %s7, %s739
        // Predicated region
        $region73: #{mlp_forward.1} parent=47 // pred_check
          %p741 = pneg %p234
        $region74: #{mlp_forward.1} parent=47 // pred_check_branch
          %743 = sbr.rel (%p741) target = $region76
        $region75: #{mlp_forward.1} parent=47 // pred_region
          %s744 = smul.u32 2, %s26
        $region76: #{mlp_forward.1} parent=47 // pred_fallthru
          _
        // Predicated region
        $region77: #{mlp_forward.1} parent=47 // pred_check
          %p745 = pneg %p234
        $region78: #{mlp_forward.1} parent=47 // pred_check_branch
          %747 = sbr.rel (%p745) target = $region80
        $region79: #{mlp_forward.1} parent=47 // pred_region
          %s748 = smul.u32 2, %s26
          %p749 = scmp.lt.s32.totalorder %s748, 1
          %s750 = scalar_select %p749, %s748, 1
          %s751 = smul.addr %s750, 8
          %s752 = scalar_lea.vmem %s7, %s751
        $region80: #{mlp_forward.1} parent=47 // pred_fallthru
          _
      $region48: #{mlp_forward.1} parent=5 // pred_fallthru
        _
      %p753 = scmp.le.s32.totalorder 2, %s17
      // Predicated region
      $region81: #{mlp_forward.1} parent=5 // pred_check
        %p754 = pneg %p753
      $region82: #{mlp_forward.1} parent=5 // pred_check_branch
        %756 = sbr.rel (%p754) target = $region84
      $region83: #{mlp_forward.1} parent=5 // pred_region
        %s757 = ssub.s32 %s17, 2
      $region84: #{mlp_forward.1} parent=5 // pred_fallthru
        _
    $region6: #{mlp_forward.1} parent=1 // loop_footer
      %s21 = sadd.s32 1, %s17
    $region7: #{mlp_forward.1} parent=1 // loop_footer_branch
      %16 = sbr.rel target = $region3
    $region8: #{mlp_forward.1} parent=1 // loop_exit
      _
    %758 = vsyncpa [#allocation4], 1
    %s759 = scalar_lea.sflag [#allocation4], 1
    %760 = vsyncpa %s759, 1
    %761 = vsyncpa [#allocation6], 1
    %s762 = scalar_lea.sflag [#allocation6], 1
    %763 = vsyncpa %s762, 1

</llo_original>
